<compile_context>
chip_gen: v5e
topology: v5e:2x2
jax: 0.10.0
libtpu: 0.0.40
codegen_flags: <defaults>
</compile_context>

<pallas_src>
import functools
import math

import jax
import jax.numpy as jnp
from jax import lax
from jax.experimental import pallas as pl
from jax.experimental.pallas import tpu as pltpu

_TABLE_VMEM_BUDGET = 20 << 20   # table-resident path only if the table fits comfortably (v7x-safe)
_TILE_VMEM_BUDGET = 8 << 20     # VMEM spent on per-tile (pe / out / gather) buffers
_MAX_TILE_ROWS = 512


def _build_pe_table(max_seq_len: int, d_model: int) -> jnp.ndarray:
    """Exact replica of the PyTorch double loop (odd cols reuse the even col's exponent)."""
    pos = jnp.arange(max_seq_len, dtype=jnp.float32)[:, None]
    col = jnp.arange(d_model, dtype=jnp.float32)[None, :]
    even_mask = (jnp.arange(d_model) % 2 == 0)[None, :]
    i_eff = jnp.where(even_mask, col, col - 1.0)
    denom = jnp.power(10000.0, 2.0 * i_eff / float(d_model))
    angle = pos / denom
    return jnp.where(even_mask, jnp.sin(angle), jnp.cos(angle)).astype(jnp.float32)


def _row_loop(n_rows: int, body, unroll: int = 8):
    """Chunk-unrolled side-effecting row loop (python-unrolled inner, fori outer)."""
    if n_rows <= 0:
        return
    if n_rows % unroll != 0:
        unroll = 1

    def outer(c, carry):
        base = c * unroll
        for u in range(unroll):
            body(base + u)
        return carry

    lax.fori_loop(0, n_rows // unroll, outer, 0)


def _vmem_table_kernel(ids_ref, emb_ref, pe_ref, out_ref, *, scale, tile_s, vocab):
    """Whole embedding table resident in VMEM; gather = dynamic in-VMEM row reads."""
    row0 = pl.program_id(0) * tile_s

    def row(j):
        tok = jnp.clip(ids_ref[row0 + j], 0, vocab - 1)      # guard OOB reads
        emb = emb_ref[pl.ds(tok, 1), :].astype(jnp.float32)
        out_ref[pl.ds(j, 1), :] = (emb * scale + pe_ref[pl.ds(j, 1), :]).astype(out_ref.dtype)

    _row_loop(tile_s, row)


def _hbm_gather_kernel(ids_ref, emb_hbm, pe_ref, out_ref, gather_buf, sems, *,
                       scale, tile_s, vocab):
    """Table stays in HBM; per-row gather DMAs are double-buffered across grid steps."""
    t = pl.program_id(0)
    nt = pl.num_programs(0)
    slot = t % 2

    def slot_base(s):
        b = s * tile_s
        return pl.multiple_of(b, 8) if tile_s % 8 == 0 else b

    def issue_tile(tile_idx, dst_slot):
        row0 = tile_idx * tile_s
        base = slot_base(dst_slot)

        def row(j):
            tok = jnp.clip(ids_ref[row0 + j], 0, vocab - 1)   # guard OOB DMA source
            pltpu.make_async_copy(
                emb_hbm.at[pl.ds(tok, 1), :],
                gather_buf.at[pl.ds(base + j, 1), :],
                sems.at[dst_slot],
            ).start()

        _row_loop(tile_s, row)

    # First step primes its own slot; every step prefetches the NEXT tile's rows into
    # the other slot BEFORE waiting, so the gather overlaps this step's compute and
    # the pipeline's PE-load / output writeback.
    @pl.when(t == 0)
    def _():
        issue_tile(t, slot)

    @pl.when(t + 1 < nt)
    def _():
        issue_tile(t + 1, 1 - slot)

    # Wait for this step's rows (one shared DMA semaphore per slot; each wait retires
    # one row-sized completion, so counts always balance).
    base = slot_base(slot)

    def wait_row(j):
        pltpu.make_async_copy(
            emb_hbm.at[pl.ds(0, 1), :],                       # size-only wait descriptor
            gather_buf.at[pl.ds(base + j, 1), :],
            sems.at[slot],
        ).wait()

    _row_loop(tile_s, wait_row)

    emb = gather_buf[pl.ds(base, tile_s), :].astype(jnp.float32)
    # Fused scale + PE add (single VPU pass, no wrapper-side pre-scaling).
    out_ref[...] = (emb * scale + pe_ref[...]).astype(out_ref.dtype)


def _choose_tile_rows(seq_len, rows, d_model, emb_itemsize, out_itemsize):
    """Largest multiple-of-8 row tile that fits the VMEM budget and keeps >=2 grid steps."""
    per_row = d_model * (2 * 4 + 2 * out_itemsize + 2 * emb_itemsize)
    max_rows = min(_MAX_TILE_ROWS, max(8, _TILE_VMEM_BUDGET // per_row))

    def pick(length):
        return [c for c in range(8, length + 1, 8) if length % c == 0 and c <= max_rows]

    cands = pick(seq_len)                      # tile never crosses a batch boundary
    if cands:
        tile = cands[-1]
        if rows // tile < 2:                   # keep >=2 grid steps (dual-TC / pipelining)
            smaller = [c for c in cands if rows // c >= 2]
            if smaller:
                tile = smaller[-1]
        return tile, False
    cands = pick(rows)                         # seq_len has no multiple-of-8 divisor
    if cands:
        return cands[-1], True                 # needs a per-row (B*S, D) PE slab
    return rows, True                          # single full-extent tile (always legal)


def positional_encoder(tokens, embedding, pe_table, *,
                       out_dtype=jnp.float32, force_hbm_gather=False):
    """tokens: int32 [B, S]; embedding: [V, D] (f32/bf16 at rest); pe_table: f32 [L, D], L >= S."""
    B, S = tokens.shape
    V, D = embedding.shape
    rows = B * S
    scale = math.sqrt(float(D))
    out_dtype = jnp.dtype(out_dtype)
    emb_itemsize = jnp.dtype(embedding.dtype).itemsize

    tile_s, pe_per_row = _choose_tile_rows(S, rows, D, emb_itemsize, out_dtype.itemsize)
    assert rows % tile_s == 0
    num_tiles = rows // tile_s

    pe_slice = pe_table[:S, :].astype(jnp.float32)            # glue: pe[:, :seq_len]
    if pe_per_row:
        pe_slab = jnp.tile(pe_slice, (B, 1))                  # (rows, D), only for odd shapes
        pe_blocks = rows // tile_s
    else:
        pe_slab = pe_slice                                    # (S, D), reused across batch
        pe_blocks = S // tile_s

    if pe_blocks == 1:
        pe_index_map = lambda t, ids: (0, 0)
    else:
        pe_index_map = lambda t, ids: (t % pe_blocks, 0)
    out_index_map = lambda t, ids: (t, 0)

    ids_flat = tokens.reshape(rows).astype(jnp.int32)

    table_bytes = V * D * emb_itemsize
    use_vmem_table = (not force_hbm_gather) and (table_bytes <= _TABLE_VMEM_BUDGET)
    tile_bytes = tile_s * D * (2 * 4 + 2 * out_dtype.itemsize)   # double-buffered pe + out

    if use_vmem_table:
        kernel = functools.partial(_vmem_table_kernel, scale=scale, tile_s=tile_s, vocab=V)
        in_specs = [
            pl.BlockSpec((V, D), lambda t, ids: (0, 0)),      # table resident in VMEM
            pl.BlockSpec((tile_s, D), pe_index_map),
        ]
        scratch_shapes = []
        vmem_needed = 2 * table_bytes + tile_bytes
        semantics = ("parallel",)                             # grid steps independent
    else:
        kernel = functools.partial(_hbm_gather_kernel, scale=scale, tile_s=tile_s, vocab=V)
        in_specs = [
            pl.BlockSpec(memory_space=pl.ANY),                # table stays in HBM
            pl.BlockSpec((tile_s, D), pe_index_map),
        ]
        scratch_shapes = [
            pltpu.VMEM((2 * tile_s, D), embedding.dtype),     # double-buffered gather slab
            pltpu.SemaphoreType.DMA((2,)),                    # one shared sem per slot
        ]
        vmem_needed = 2 * tile_s * D * emb_itemsize + tile_bytes
        semantics = ("arbitrary",)      # cross-step DMA prefetch => steps must run in order

    vmem_limit = int(min(56 << 20, max(vmem_needed + (4 << 20), 16 << 20)))

    out_flat = pl.pallas_call(
        kernel,
        out_shape=jax.ShapeDtypeStruct((rows, D), out_dtype),
        grid_spec=pltpu.PrefetchScalarGridSpec(
            num_scalar_prefetch=1,          # ids -> SMEM (HBM path reads NEXT tile's ids too)
            grid=(num_tiles,),
            in_specs=in_specs,
            out_specs=pl.BlockSpec((tile_s, D), out_index_map),
            scratch_shapes=scratch_shapes,
        ),
        compiler_params=pltpu.CompilerParams(
            dimension_semantics=semantics,
            vmem_limit_bytes=vmem_limit,
        ),
    )(ids_flat, embedding, pe_slab)

    return out_flat.reshape(B, S, D)        # pure metadata reshape, no copy / slice


def positional_encoder_ref(tokens, embedding, pe_table):
    """Pure-JAX reference of the PyTorch forward."""
    D = embedding.shape[1]
    S = tokens.shape[1]
    x = embedding[tokens].astype(jnp.float32)
    x = x * math.sqrt(float(D))
    return x + pe_table[None, :S, :]


if __name__ == "__main__":
    key = jax.random.PRNGKey(0)
    k_tok, k_emb, k_tok2, k_emb2 = jax.random.split(key, 4)

    # Demo 1: small shapes implied by the module (batch=2, seq=8, d_model=32, vocab=16).
    # The table trivially fits VMEM -> resident-table gather path.
    B, S, D, V, L = 2, 8, 32, 16, 16
    tokens = jax.random.randint(k_tok, (B, S), minval=0, maxval=V, dtype=jnp.int32)
    embedding = jax.random.normal(k_emb, (V, D), dtype=jnp.float32)
    pe_table = _build_pe_table(L, D)

    out = jax.block_until_ready(positional_encoder(tokens, embedding, pe_table))
    ref = positional_encoder_ref(tokens, embedding, pe_table)
    assert out.shape == (B, S, D), out.shape
    assert jnp.allclose(out, ref, atol=1e-5, rtol=1e-5), float(jnp.max(jnp.abs(out - ref)))

    # Demo 2: exercise the HBM-gather path (cross-step double-buffered row DMAs).
    B2, S2, D2, V2, L2 = 2, 64, 128, 64, 64
    tokens2 = jax.random.randint(k_tok2, (B2, S2), minval=0, maxval=V2, dtype=jnp.int32)
    embedding2 = jax.random.normal(k_emb2, (V2, D2), dtype=jnp.float32)
    pe_table2 = _build_pe_table(L2, D2)

    out2 = jax.block_until_ready(
        positional_encoder(tokens2, embedding2, pe_table2, force_hbm_gather=True))
    ref2 = positional_encoder_ref(tokens2, embedding2, pe_table2)
    assert out2.shape == (B2, S2, D2), out2.shape
    assert jnp.allclose(out2, ref2, atol=1e-5, rtol=1e-5), float(jnp.max(jnp.abs(out2 - ref2)))

    print("KERNEL_OK")
</pallas_src>

<mosaic_0001>
module attributes {stable_mosaic.version = 11 : i64} {
  func.func @_vmem_table_kernel(%arg0: i32, %arg1: memref<16xi32, #tpu.memory_space<smem>>, %arg2: memref<16x32xf32, #tpu.memory_space<vmem>>, %arg3: memref<8x32xf32, #tpu.memory_space<vmem>>, %arg4: memref<8x32xf32, #tpu.memory_space<vmem>>) attributes {dimension_semantics = [#tpu.dimension_semantics<parallel>], iteration_bounds = array<i64: 2>, scalar_prefetch = 1 : i64, scratch_operands = 0 : i64, tpu.core_type = #tpu.core_type<tc>, window_params = [{pipeline_mode = #tpu.pipeline_mode<synchronous>, transform_indices = @transform_0, window_bounds = array<i64: 16, 32>}, {pipeline_mode = #tpu.pipeline_mode<synchronous>, transform_indices = @transform_1, window_bounds = array<i64: 8, 32>}, {transform_indices = @transform_2, window_bounds = array<i64: 8, 32>}]} {
    %c8_i32 = arith.constant 8 : i32
    %0 = arith.muli %arg0, %c8_i32 : i32
    %c0_i32 = arith.constant 0 : i32
    %c8_i32_0 = arith.constant 8 : i32
    %1 = arith.muli %c0_i32, %c8_i32_0 : i32
    %c0_i32_1 = arith.constant 0 : i32
    %2 = arith.addi %1, %c0_i32_1 : i32
    %3 = arith.addi %0, %2 : i32
    %4 = arith.index_cast %3 : i32 to index
    %5 = memref.load %arg1[%4] : memref<16xi32, #tpu.memory_space<smem>>
    %c0_i32_2 = arith.constant 0 : i32
    %c15_i32 = arith.constant 15 : i32
    %6 = arith.maxsi %c0_i32_2, %5 : i32
    %7 = arith.minsi %c15_i32, %6 : i32
    %8 = arith.index_cast %7 : i32 to index
    %c0 = arith.constant 0 : index
    %9 = vector.load %arg2[%8, %c0] : memref<16x32xf32, #tpu.memory_space<vmem>>, vector<1x32xf32>
    %cst = arith.constant 5.65685415 : f32
    %10 = vector.broadcast %cst : f32 to vector<1x32xf32>
    %11 = arith.mulf %9, %10 : vector<1x32xf32>
    %12 = arith.index_cast %2 : i32 to index
    %c0_3 = arith.constant 0 : index
    %13 = vector.load %arg3[%12, %c0_3] : memref<8x32xf32, #tpu.memory_space<vmem>>, vector<1x32xf32>
    %14 = arith.addf %11, %13 : vector<1x32xf32>
    %15 = arith.index_cast %2 : i32 to index
    %c0_4 = arith.constant 0 : index
    %16 = vector.load %arg4[%15, %c0_4] : memref<8x32xf32, #tpu.memory_space<vmem>>, vector<1x32xf32>
    tpu.vector_store %arg4[%15, %c0_4], %14 {strides = array<i32>} : memref<8x32xf32, #tpu.memory_space<vmem>>, vector<1x32xf32>,
    %c1_i32 = arith.constant 1 : i32
    %17 = arith.addi %1, %c1_i32 : i32
    %18 = arith.addi %0, %17 : i32
    %19 = arith.index_cast %18 : i32 to index
    %20 = memref.load %arg1[%19] : memref<16xi32, #tpu.memory_space<smem>>
    %c0_i32_5 = arith.constant 0 : i32
    %c15_i32_6 = arith.constant 15 : i32
    %21 = arith.maxsi %c0_i32_5, %20 : i32
    %22 = arith.minsi %c15_i32_6, %21 : i32
    %23 = arith.index_cast %22 : i32 to index
    %c0_7 = arith.constant 0 : index
    %24 = vector.load %arg2[%23, %c0_7] : memref<16x32xf32, #tpu.memory_space<vmem>>, vector<1x32xf32>
    %cst_8 = arith.constant 5.65685415 : f32
    %25 = vector.broadcast %cst_8 : f32 to vector<1x32xf32>
    %26 = arith.mulf %24, %25 : vector<1x32xf32>
    %27 = arith.index_cast %17 : i32 to index
    %c0_9 = arith.constant 0 : index
    %28 = vector.load %arg3[%27, %c0_9] : memref<8x32xf32, #tpu.memory_space<vmem>>, vector<1x32xf32>
    %29 = arith.addf %26, %28 : vector<1x32xf32>
    %30 = arith.index_cast %17 : i32 to index
    %c0_10 = arith.constant 0 : index
    %31 = vector.load %arg4[%30, %c0_10] : memref<8x32xf32, #tpu.memory_space<vmem>>, vector<1x32xf32>
    tpu.vector_store %arg4[%30, %c0_10], %29 {strides = array<i32>} : memref<8x32xf32, #tpu.memory_space<vmem>>, vector<1x32xf32>,
    %c2_i32 = arith.constant 2 : i32
    %32 = arith.addi %1, %c2_i32 : i32
    %33 = arith.addi %0, %32 : i32
    %34 = arith.index_cast %33 : i32 to index
    %35 = memref.load %arg1[%34] : memref<16xi32, #tpu.memory_space<smem>>
    %c0_i32_11 = arith.constant 0 : i32
    %c15_i32_12 = arith.constant 15 : i32
    %36 = arith.maxsi %c0_i32_11, %35 : i32
    %37 = arith.minsi %c15_i32_12, %36 : i32
    %38 = arith.index_cast %37 : i32 to index
    %c0_13 = arith.constant 0 : index
    %39 = vector.load %arg2[%38, %c0_13] : memref<16x32xf32, #tpu.memory_space<vmem>>, vector<1x32xf32>
    %cst_14 = arith.constant 5.65685415 : f32
    %40 = vector.broadcast %cst_14 : f32 to vector<1x32xf32>
    %41 = arith.mulf %39, %40 : vector<1x32xf32>
    %42 = arith.index_cast %32 : i32 to index
    %c0_15 = arith.constant 0 : index
    %43 = vector.load %arg3[%42, %c0_15] : memref<8x32xf32, #tpu.memory_space<vmem>>, vector<1x32xf32>
    %44 = arith.addf %41, %43 : vector<1x32xf32>
    %45 = arith.index_cast %32 : i32 to index
    %c0_16 = arith.constant 0 : index
    %46 = vector.load %arg4[%45, %c0_16] : memref<8x32xf32, #tpu.memory_space<vmem>>, vector<1x32xf32>
    tpu.vector_store %arg4[%45, %c0_16], %44 {strides = array<i32>} : memref<8x32xf32, #tpu.memory_space<vmem>>, vector<1x32xf32>,
    %c3_i32 = arith.constant 3 : i32
    %47 = arith.addi %1, %c3_i32 : i32
    %48 = arith.addi %0, %47 : i32
    %49 = arith.index_cast %48 : i32 to index
    %50 = memref.load %arg1[%49] : memref<16xi32, #tpu.memory_space<smem>>
    %c0_i32_17 = arith.constant 0 : i32
    %c15_i32_18 = arith.constant 15 : i32
    %51 = arith.maxsi %c0_i32_17, %50 : i32
    %52 = arith.minsi %c15_i32_18, %51 : i32
    %53 = arith.index_cast %52 : i32 to index
    %c0_19 = arith.constant 0 : index
    %54 = vector.load %arg2[%53, %c0_19] : memref<16x32xf32, #tpu.memory_space<vmem>>, vector<1x32xf32>
    %cst_20 = arith.constant 5.65685415 : f32
    %55 = vector.broadcast %cst_20 : f32 to vector<1x32xf32>
    %56 = arith.mulf %54, %55 : vector<1x32xf32>
    %57 = arith.index_cast %47 : i32 to index
    %c0_21 = arith.constant 0 : index
    %58 = vector.load %arg3[%57, %c0_21] : memref<8x32xf32, #tpu.memory_space<vmem>>, vector<1x32xf32>
    %59 = arith.addf %56, %58 : vector<1x32xf32>
    %60 = arith.index_cast %47 : i32 to index
    %c0_22 = arith.constant 0 : index
    %61 = vector.load %arg4[%60, %c0_22] : memref<8x32xf32, #tpu.memory_space<vmem>>, vector<1x32xf32>
    tpu.vector_store %arg4[%60, %c0_22], %59 {strides = array<i32>} : memref<8x32xf32, #tpu.memory_space<vmem>>, vector<1x32xf32>,
    %c4_i32 = arith.constant 4 : i32
    %62 = arith.addi %1, %c4_i32 : i32
    %63 = arith.addi %0, %62 : i32
    %64 = arith.index_cast %63 : i32 to index
    %65 = memref.load %arg1[%64] : memref<16xi32, #tpu.memory_space<smem>>
    %c0_i32_23 = arith.constant 0 : i32
    %c15_i32_24 = arith.constant 15 : i32
    %66 = arith.maxsi %c0_i32_23, %65 : i32
    %67 = arith.minsi %c15_i32_24, %66 : i32
    %68 = arith.index_cast %67 : i32 to index
    %c0_25 = arith.constant 0 : index
    %69 = vector.load %arg2[%68, %c0_25] : memref<16x32xf32, #tpu.memory_space<vmem>>, vector<1x32xf32>
    %cst_26 = arith.constant 5.65685415 : f32
    %70 = vector.broadcast %cst_26 : f32 to vector<1x32xf32>
    %71 = arith.mulf %69, %70 : vector<1x32xf32>
    %72 = arith.index_cast %62 : i32 to index
    %c0_27 = arith.constant 0 : index
    %73 = vector.load %arg3[%72, %c0_27] : memref<8x32xf32, #tpu.memory_space<vmem>>, vector<1x32xf32>
    %74 = arith.addf %71, %73 : vector<1x32xf32>
    %75 = arith.index_cast %62 : i32 to index
    %c0_28 = arith.constant 0 : index
    %76 = vector.load %arg4[%75, %c0_28] : memref<8x32xf32, #tpu.memory_space<vmem>>, vector<1x32xf32>
    tpu.vector_store %arg4[%75, %c0_28], %74 {strides = array<i32>} : memref<8x32xf32, #tpu.memory_space<vmem>>, vector<1x32xf32>,
    %c5_i32 = arith.constant 5 : i32
    %77 = arith.addi %1, %c5_i32 : i32
    %78 = arith.addi %0, %77 : i32
    %79 = arith.index_cast %78 : i32 to index
    %80 = memref.load %arg1[%79] : memref<16xi32, #tpu.memory_space<smem>>
    %c0_i32_29 = arith.constant 0 : i32
    %c15_i32_30 = arith.constant 15 : i32
    %81 = arith.maxsi %c0_i32_29, %80 : i32
    %82 = arith.minsi %c15_i32_30, %81 : i32
    %83 = arith.index_cast %82 : i32 to index
    %c0_31 = arith.constant 0 : index
    %84 = vector.load %arg2[%83, %c0_31] : memref<16x32xf32, #tpu.memory_space<vmem>>, vector<1x32xf32>
    %cst_32 = arith.constant 5.65685415 : f32
    %85 = vector.broadcast %cst_32 : f32 to vector<1x32xf32>
    %86 = arith.mulf %84, %85 : vector<1x32xf32>
    %87 = arith.index_cast %77 : i32 to index
    %c0_33 = arith.constant 0 : index
    %88 = vector.load %arg3[%87, %c0_33] : memref<8x32xf32, #tpu.memory_space<vmem>>, vector<1x32xf32>
    %89 = arith.addf %86, %88 : vector<1x32xf32>
    %90 = arith.index_cast %77 : i32 to index
    %c0_34 = arith.constant 0 : index
    %91 = vector.load %arg4[%90, %c0_34] : memref<8x32xf32, #tpu.memory_space<vmem>>, vector<1x32xf32>
    tpu.vector_store %arg4[%90, %c0_34], %89 {strides = array<i32>} : memref<8x32xf32, #tpu.memory_space<vmem>>, vector<1x32xf32>,
    %c6_i32 = arith.constant 6 : i32
    %92 = arith.addi %1, %c6_i32 : i32
    %93 = arith.addi %0, %92 : i32
    %94 = arith.index_cast %93 : i32 to index
    %95 = memref.load %arg1[%94] : memref<16xi32, #tpu.memory_space<smem>>
    %c0_i32_35 = arith.constant 0 : i32
    %c15_i32_36 = arith.constant 15 : i32
    %96 = arith.maxsi %c0_i32_35, %95 : i32
    %97 = arith.minsi %c15_i32_36, %96 : i32
    %98 = arith.index_cast %97 : i32 to index
    %c0_37 = arith.constant 0 : index
    %99 = vector.load %arg2[%98, %c0_37] : memref<16x32xf32, #tpu.memory_space<vmem>>, vector<1x32xf32>
    %cst_38 = arith.constant 5.65685415 : f32
    %100 = vector.broadcast %cst_38 : f32 to vector<1x32xf32>
    %101 = arith.mulf %99, %100 : vector<1x32xf32>
    %102 = arith.index_cast %92 : i32 to index
    %c0_39 = arith.constant 0 : index
    %103 = vector.load %arg3[%102, %c0_39] : memref<8x32xf32, #tpu.memory_space<vmem>>, vector<1x32xf32>
    %104 = arith.addf %101, %103 : vector<1x32xf32>
    %105 = arith.index_cast %92 : i32 to index
    %c0_40 = arith.constant 0 : index
    %106 = vector.load %arg4[%105, %c0_40] : memref<8x32xf32, #tpu.memory_space<vmem>>, vector<1x32xf32>
    tpu.vector_store %arg4[%105, %c0_40], %104 {strides = array<i32>} : memref<8x32xf32, #tpu.memory_space<vmem>>, vector<1x32xf32>,
    %c7_i32 = arith.constant 7 : i32
    %107 = arith.addi %1, %c7_i32 : i32
    %108 = arith.addi %0, %107 : i32
    %109 = arith.index_cast %108 : i32 to index
    %110 = memref.load %arg1[%109] : memref<16xi32, #tpu.memory_space<smem>>
    %c0_i32_41 = arith.constant 0 : i32
    %c15_i32_42 = arith.constant 15 : i32
    %111 = arith.maxsi %c0_i32_41, %110 : i32
    %112 = arith.minsi %c15_i32_42, %111 : i32
    %113 = arith.index_cast %112 : i32 to index
    %c0_43 = arith.constant 0 : index
    %114 = vector.load %arg2[%113, %c0_43] : memref<16x32xf32, #tpu.memory_space<vmem>>, vector<1x32xf32>
    %cst_44 = arith.constant 5.65685415 : f32
    %115 = vector.broadcast %cst_44 : f32 to vector<1x32xf32>
    %116 = arith.mulf %114, %115 : vector<1x32xf32>
    %117 = arith.index_cast %107 : i32 to index
    %c0_45 = arith.constant 0 : index
    %118 = vector.load %arg3[%117, %c0_45] : memref<8x32xf32, #tpu.memory_space<vmem>>, vector<1x32xf32>
    %119 = arith.addf %116, %118 : vector<1x32xf32>
    %120 = arith.index_cast %107 : i32 to index
    %c0_46 = arith.constant 0 : index
    %121 = vector.load %arg4[%120, %c0_46] : memref<8x32xf32, #tpu.memory_space<vmem>>, vector<1x32xf32>
    tpu.vector_store %arg4[%120, %c0_46], %119 {strides = array<i32>} : memref<8x32xf32, #tpu.memory_space<vmem>>, vector<1x32xf32>,
    %c1_i32_47 = arith.constant 1 : i32
    return
  }
  func.func @transform_0(%arg0: i32, %arg1: memref<16xi32, #tpu.memory_space<smem>>) -> (i32, i32) {
    %c0_i32 = arith.constant 0 : i32
    %c0_i32_0 = arith.constant 0 : i32
    %c0_i32_1 = arith.constant 0 : i32
    return %c0_i32, %c0_i32_0 : i32, i32
  }
  func.func @transform_1(%arg0: i32, %arg1: memref<16xi32, #tpu.memory_space<smem>>) -> (i32, i32) {
    %c0_i32 = arith.constant 0 : i32
    %c0_i32_0 = arith.constant 0 : i32
    %c0_i32_1 = arith.constant 0 : i32
    return %c0_i32, %c0_i32_0 : i32, i32
  }
  func.func @transform_2(%arg0: i32, %arg1: memref<16xi32, #tpu.memory_space<smem>>) -> (i32, i32) {
    %c0_i32 = arith.constant 0 : i32
    %c0_i32_0 = arith.constant 0 : i32
    return %arg0, %c0_i32 : i32, i32
  }
}

</mosaic_0001>

<llo_original>
// kernel: tpu_custom_call.1
$region0: #{tpu_custom_call.1}
  #allocation0 [shape = 'u32[]', space=smem, size = 0x4, offset = 0x4, fixed_abs, tag = 'smem constant byte address 0x4 - core index']
  #allocation1 [shape = 'u32[72,128]{1,0:T(1,128)}', space=vmem, size = 0x9000, scoped, tag = 'internal scratch']
  #allocation2 [shape = 's32[1]{0}', space=sflag, size = 0x4, scoped, tag = 'scoped memory for tpu_custom_call.1']
  #allocation3 [shape = 'u8[512]{0}', space=smem, size = 0x200, scoped, tag = 'prefetched SMEM operand 0']
  %s0 = inlined_call_operand.hbm [shape: s32[16], index: 0, kind: input, shape index: {}]
  %s1 = inlined_call_operand.hbm [shape: f32[16,32], index: 1, kind: input, shape index: {}]
  %s2 = inlined_call_operand.hbm [shape: f32[8,32], index: 2, kind: input, shape index: {}]
  %s3 = inlined_call_operand.hbm [shape: f32[16,32], index: 3, kind: output, shape index: {}]
  %s4 = sld [smem:[#allocation0]]
  $region49: #{tpu_custom_call.1} parent=0
    _
  %s6 = ssub.s32 1, %s4
  %s7 = scalar_select 0, %s6, %s4
  %s9 = sshll.u32 %s0, 4
  %s10 = int_to_ptr.hbm [resolvable:$true] %s9
  %12 = dma.hbm_to_smem %s10, 16, [#allocation3], [#allocation2]
  %14 = dma.done [#allocation2], 16
  %15 = sfence
  $region1: #{tpu_custom_call.1} parent=0
    #allocation4 [shape = 'u8[8192]{0}', space=vmem, size = 0x2000, scoped, tag = 'input window, operand 1, single buffered']
    #allocation5 [shape = 's32[2]{0}', space=sflag, size = 0x8, scoped, tag = 'scoped memory for tpu_custom_call.1']
    #allocation6 [shape = 's32[2]{0}', space=sflag, size = 0x8, scoped, tag = 'scoped memory for tpu_custom_call.1']
    #allocation7 [shape = 'u8[4096]{0}', space=vmem, size = 0x1000, scoped, tag = 'input window, operand 2, single buffered']
    #allocation8 [shape = 's32[1]{0}', space=sflag, size = 0x4, scoped, tag = 'scoped memory for tpu_custom_call.1']
    #allocation9 [shape = 'u8[8192]{0}', space=vmem, size = 0x2000, scoped, tag = 'output window, operand 0']
    %16 = vsyncpa [#allocation5], 0
    %17 = vsyncpa [#allocation8], 0
    %18 = vsyncpa [#allocation6], 0
    %s19 = scalar_lea.sflag [#allocation6], 1
    %20 = vsyncpa %s19, 0
    loop: start=0, step=1, limit=4
    $region2: #{tpu_custom_call.1} parent=1 // loop_pre_header
      _
    $region3: #{tpu_custom_call.1} parent=1 // loop_header
      %s22 = sphi 0, %s26
      %p23 = scmp.ge.s32.totalorder %s22, 4
      %s30 = sphi 0, %s30
      %s32 = sphi 0, %s30
      %s33 = sphi 0, %s32
      %s47 = sphi 0, %s33
      %s51 = sphi 0, %s51
      %s53 = sphi 0, %s51
      %s54 = sphi 0, %s53
      %s68 = sphi 0, %s54
      %s74 = sphi 0, %s76
      %s77 = sphi 0, %s74
      %s78 = sphi 0, %s77
      %s94 = sphi 0, %s78
    $region4: #{tpu_custom_call.1} parent=1 // loop_header_branch
      %25 = sbr.rel (%p23) target = $region8
    $region5: #{tpu_custom_call.1} parent=1 // loop_body
      %s27 = ssub.s32 %s22, 1
      %s28 = ssub.s32 %s22, 2
      %s29 = sadd.s32 %s22, 1
      %s31 = sadd.s32 %s30, 1
      %p34 = scmp.eq.s32.totalorder %s22, 1
      %p35 = scmp.ne.s32.totalorder %s30, %s32
      %p36 = scmp.eq.s32.totalorder %s22, 0
      %p37 = por %p35, %p36
      %p38 = scmp.ne.s32.totalorder %s30, %s32
      %p39 = scmp.eq.s32.totalorder %s27, 1
      %p40 = por %p38, %p39
      %p41 = scmp.ne.s32.totalorder %s32, %s33
      %p42 = scmp.eq.s32.totalorder %s27, 0
      %p43 = por %p41, %p42
      %p44 = scmp.ne.s32.totalorder %s32, %s33
      %p45 = scmp.eq.s32.totalorder %s28, 1
      %p46 = por %p44, %p45
      %p48 = scmp.ne.s32.totalorder %s33, %s47
      %p49 = scmp.eq.s32.totalorder %s28, 0
      %p50 = por %p48, %p49
      %s52 = sadd.s32 %s51, 1
      %p55 = scmp.eq.s32.totalorder %s22, 1
      %p56 = scmp.ne.s32.totalorder %s51, %s53
      %p57 = scmp.eq.s32.totalorder %s22, 0
      %p58 = por %p56, %p57
      %p59 = scmp.ne.s32.totalorder %s51, %s53
      %p60 = scmp.eq.s32.totalorder %s27, 1
      %p61 = por %p59, %p60
      %p62 = scmp.ne.s32.totalorder %s53, %s54
      %p63 = scmp.eq.s32.totalorder %s27, 0
      %p64 = por %p62, %p63
      %p65 = scmp.ne.s32.totalorder %s53, %s54
      %p66 = scmp.eq.s32.totalorder %s28, 1
      %p67 = por %p65, %p66
      %p69 = scmp.ne.s32.totalorder %s54, %s68
      %p70 = scmp.eq.s32.totalorder %s28, 0
      %p71 = por %p69, %p70
      %s72 = ssub.s32 %s22, %s29
      %p73 = scmp.eq.s32.totalorder %s72, 0
      %s75 = sadd.s32 %s74, 1
      %s76 = scalar_select %p73, %s74, %s75
      %p79 = pneg %p73
      %p80 = scmp.eq.s32.totalorder %s22, 1
      %p81 = por %p79, %p80
      %p82 = scmp.ne.s32.totalorder %s74, %s77
      %p83 = scmp.eq.s32.totalorder %s22, 0
      %p84 = por %p82, %p83
      %p85 = scmp.ne.s32.totalorder %s74, %s77
      %p86 = scmp.eq.s32.totalorder %s27, 1
      %p87 = por %p85, %p86
      %p88 = scmp.ne.s32.totalorder %s77, %s78
      %p89 = scmp.eq.s32.totalorder %s27, 0
      %p90 = por %p88, %p89
      %p91 = scmp.ne.s32.totalorder %s77, %s78
      %p92 = scmp.eq.s32.totalorder %s28, 1
      %p93 = por %p91, %p92
      %p95 = scmp.ne.s32.totalorder %s78, %s94
      %p96 = scmp.eq.s32.totalorder %s28, 0
      %p97 = por %p95, %p96
      %p98 = scmp.le.s32.totalorder 1, %s22
      %p99 = scmp.lt.s32.totalorder %s22, 3
      %p100 = pnand %p98, %p99
      %p101 = pneg %p100
      // Predicated region
      $region9: #{tpu_custom_call.1} parent=5 // pred_check
        _
      $region10: #{tpu_custom_call.1} parent=5 // pred_check_branch
        %103 = sbr.rel (%p100) target = $region12
      $region11: #{tpu_custom_call.1} parent=5 // pred_region
        %s104 = ssub.s32 %s22, 1
        // Predicated region
        $region13: #{tpu_custom_call.1} parent=11 // pred_check
          %p105 = pneg %p43
        $region14: #{tpu_custom_call.1} parent=11 // pred_check_branch
          %107 = sbr.rel (%p105) target = $region16
        $region15: #{tpu_custom_call.1} parent=11 // pred_region
          %109 = vsyncadd [#allocation5], 0
          %s110 = sshll.u32 %s1, 4
          %s111 = int_to_ptr.hbm [resolvable:$true] %s110
          %s112 = sshll.u32 [#allocation4], 4
          %s113 = int_to_ptr.vmem [resolvable:$true] %s112
          %118 = dma.hbm_to_vmem [thread:$0]  %s111, 256, %s113, [#allocation5], 128, 128, 8
        $region16: #{tpu_custom_call.1} parent=11 // pred_fallthru
          _
        // Predicated region
        $region17: #{tpu_custom_call.1} parent=11 // pred_check
          %p119 = pneg %p64
        $region18: #{tpu_custom_call.1} parent=11 // pred_check_branch
          %121 = sbr.rel (%p119) target = $region20
        $region19: #{tpu_custom_call.1} parent=11 // pred_region
          %123 = vsyncadd [#allocation8], 0
          %s125 = sshll.u32 %s2, 4
          %s126 = int_to_ptr.hbm [resolvable:$true] %s125
          %s127 = sshll.u32 [#allocation7], 4
          %s128 = int_to_ptr.vmem [resolvable:$true] %s127
          %130 = dma.hbm_to_vmem [thread:$0]  %s126, 128, %s128, [#allocation8]
        $region20: #{tpu_custom_call.1} parent=11 // pred_fallthru
          _
      $region12: #{tpu_custom_call.1} parent=5 // pred_fallthru
        _
      %p131 = scmp.lt.s32.totalorder %s22, 2
      // Predicated region
      $region21: #{tpu_custom_call.1} parent=5 // pred_check
        %p132 = pneg %p131
      $region22: #{tpu_custom_call.1} parent=5 // pred_check_branch
        %134 = sbr.rel (%p132) target = $region24
      $region23: #{tpu_custom_call.1} parent=5 // pred_region
        _
      $region24: #{tpu_custom_call.1} parent=5 // pred_fallthru
        _
      %p135 = scmp.le.s32.totalorder 1, %s22
      %p136 = scmp.lt.s32.totalorder %s22, 3
      %p137 = pnand %p135, %p136
      %p138 = pneg %p137
      // Predicated region
      $region25: #{tpu_custom_call.1} parent=5 // pred_check
        _
      $region26: #{tpu_custom_call.1} parent=5 // pred_check_branch
        %140 = sbr.rel (%p137) target = $region28
      $region27: #{tpu_custom_call.1} parent=5 // pred_region
        %s141 = ssub.s32 %s22, 1
        // Predicated region
        $region29: #{tpu_custom_call.1} parent=27 // pred_check
          %p142 = pneg %p43
        $region30: #{tpu_custom_call.1} parent=27 // pred_check_branch
          %144 = sbr.rel (%p142) target = $region32
        $region31: #{tpu_custom_call.1} parent=27 // pred_region
          %146 = dma.done [#allocation5], 256
        $region32: #{tpu_custom_call.1} parent=27 // pred_fallthru
          _
        // Predicated region
        $region33: #{tpu_custom_call.1} parent=27 // pred_check
          %p147 = pneg %p64
        $region34: #{tpu_custom_call.1} parent=27 // pred_check_branch
          %149 = sbr.rel (%p147) target = $region36
        $region35: #{tpu_custom_call.1} parent=27 // pred_region
          %151 = dma.done [#allocation8], 128
        $region36: #{tpu_custom_call.1} parent=27 // pred_fallthru
          _
        %p152 = pneg %p43
        %p153 = pneg %p40
        %p154 = pneg %p64
        %p155 = pneg %p61
        %p156 = pneg %p90
        %p157 = pneg %p87
        %s158 = sand.u32 %s77, 1
        %s159 = scalar_lea.sflag [#allocation6], %s158
        %s160 = sand.u32 %s77, 1
        %s161 = smul.addr %s160, 8
        %s162 = scalar_lea.vmem [#allocation9], %s161
        %s163 = smul.u32 %s27, 8
        %s164 = sld [smem:[#allocation3 + %s163]]
        %p165 = scmp.gt.s32.totalorder %s164, 0
        %s166 = scalar_select %p165, %s164, 0
        %p167 = scmp.lt.s32.totalorder %s166, 15
        %s168 = scalar_select %p167, %s166, 15
        %s169 = scalar_lea.vmem [#allocation4], %s168
        %v170 = vld [vmem:[%s169] sm:$0x1]
        %v171 = vmul.f32 %v170, 5.656854
        %v172 = vld [vmem:[#allocation7] sm:$0x1]
        %v173 = vadd.f32 %v171, %v172
        %vm174 = vcmask 253952
        %175 = vst.msk [vmem:[%s162] sm:$0x1] %vm174, %v173
        %s176 = sadd.s32 %s163, 1
        %s177 = sld [smem:[#allocation3 + %s176]]
        %p178 = scmp.gt.s32.totalorder %s177, 0
        %s179 = scalar_select %p178, %s177, 0
        %p180 = scmp.lt.s32.totalorder %s179, 15
        %s181 = scalar_select %p180, %s179, 15
        %s182 = scalar_lea.vmem [#allocation4], %s181
        %v183 = vld [vmem:[%s182] sm:$0x1]
        %v184 = vmul.f32 %v183, 5.656854
        %v185 = vld [vmem:[#allocation7 + $0x1] sm:$0x1]
        %v186 = vadd.f32 %v184, %v185
        %187 = vst.msk [vmem:[%s162 + $0x1] sm:$0x1] %vm174, %v186
        %s188 = sadd.s32 %s163, 2
        %s189 = sld [smem:[#allocation3 + %s188]]
        %p190 = scmp.gt.s32.totalorder %s189, 0
        %s191 = scalar_select %p190, %s189, 0
        %p192 = scmp.lt.s32.totalorder %s191, 15
        %s193 = scalar_select %p192, %s191, 15
        %s194 = scalar_lea.vmem [#allocation4], %s193
        %v195 = vld [vmem:[%s194] sm:$0x1]
        %v196 = vmul.f32 %v195, 5.656854
        %v197 = vld [vmem:[#allocation7 + $0x2] sm:$0x1]
        %v198 = vadd.f32 %v196, %v197
        %199 = vst.msk [vmem:[%s162 + $0x2] sm:$0x1] %vm174, %v198
        %s200 = sadd.s32 %s163, 3
        %s201 = sld [smem:[#allocation3 + %s200]]
        %p202 = scmp.gt.s32.totalorder %s201, 0
        %s203 = scalar_select %p202, %s201, 0
        %p204 = scmp.lt.s32.totalorder %s203, 15
        %s205 = scalar_select %p204, %s203, 15
        %s206 = scalar_lea.vmem [#allocation4], %s205
        %v207 = vld [vmem:[%s206] sm:$0x1]
        %v208 = vmul.f32 %v207, 5.656854
        %v209 = vld [vmem:[#allocation7 + $0x3] sm:$0x1]
        %v210 = vadd.f32 %v208, %v209
        %211 = vst.msk [vmem:[%s162 + $0x3] sm:$0x1] %vm174, %v210
        %s212 = sadd.s32 %s163, 4
        %s213 = sld [smem:[#allocation3 + %s212]]
        %p214 = scmp.gt.s32.totalorder %s213, 0
        %s215 = scalar_select %p214, %s213, 0
        %p216 = scmp.lt.s32.totalorder %s215, 15
        %s217 = scalar_select %p216, %s215, 15
        %s218 = scalar_lea.vmem [#allocation4], %s217
        %v219 = vld [vmem:[%s218] sm:$0x1]
        %v220 = vmul.f32 %v219, 5.656854
        %v221 = vld [vmem:[#allocation7 + $0x4] sm:$0x1]
        %v222 = vadd.f32 %v220, %v221
        %223 = vst.msk [vmem:[%s162 + $0x4] sm:$0x1] %vm174, %v222
        %s224 = sadd.s32 %s163, 5
        %s225 = sld [smem:[#allocation3 + %s224]]
        %p226 = scmp.gt.s32.totalorder %s225, 0
        %s227 = scalar_select %p226, %s225, 0
        %p228 = scmp.lt.s32.totalorder %s227, 15
        %s229 = scalar_select %p228, %s227, 15
        %s230 = scalar_lea.vmem [#allocation4], %s229
        %v231 = vld [vmem:[%s230] sm:$0x1]
        %v232 = vmul.f32 %v231, 5.656854
        %v233 = vld [vmem:[#allocation7 + $0x5] sm:$0x1]
        %v234 = vadd.f32 %v232, %v233
        %235 = vst.msk [vmem:[%s162 + $0x5] sm:$0x1] %vm174, %v234
        %s236 = sadd.s32 %s163, 6
        %s237 = sld [smem:[#allocation3 + %s236]]
        %p238 = scmp.gt.s32.totalorder %s237, 0
        %s239 = scalar_select %p238, %s237, 0
        %p240 = scmp.lt.s32.totalorder %s239, 15
        %s241 = scalar_select %p240, %s239, 15
        %s242 = scalar_lea.vmem [#allocation4], %s241
        %v243 = vld [vmem:[%s242] sm:$0x1]
        %v244 = vmul.f32 %v243, 5.656854
        %v245 = vld [vmem:[#allocation7 + $0x6] sm:$0x1]
        %v246 = vadd.f32 %v244, %v245
        %247 = vst.msk [vmem:[%s162 + $0x6] sm:$0x1] %vm174, %v246
        %s248 = sadd.s32 %s163, 7
        %s249 = sld [smem:[#allocation3 + %s248]]
        %p250 = scmp.gt.s32.totalorder %s249, 0
        %s251 = scalar_select %p250, %s249, 0
        %p252 = scmp.lt.s32.totalorder %s251, 15
        %s253 = scalar_select %p252, %s251, 15
        %s254 = scalar_lea.vmem [#allocation4], %s253
        %v255 = vld [vmem:[%s254] sm:$0x1]
        %v256 = vmul.f32 %v255, 5.656854
        %v257 = vld [vmem:[#allocation7 + $0x7] sm:$0x1]
        %v258 = vadd.f32 %v256, %v257
        %259 = vst.msk [vmem:[%s162 + $0x7] sm:$0x1] %vm174, %v258
        %s260 = sand.u32 %s77, 1
        %s261 = scalar_lea.sflag [#allocation6], %s260
        %s262 = sand.u32 %s77, 1
        %s263 = smul.addr %s262, 8
        %s264 = scalar_lea.vmem [#allocation9], %s263
        // Predicated region
        $region37: #{tpu_custom_call.1} parent=27 // pred_check
          %p265 = pneg %p87
        $region38: #{tpu_custom_call.1} parent=27 // pred_check_branch
          %267 = sbr.rel (%p265) target = $region40
        $region39: #{tpu_custom_call.1} parent=27 // pred_region
          %269 = vsyncadd %s261, 0
          %s270 = smul.addr %s27, 8
          %s271 = scalar_lea.hbm %s3, %s270
          %s273 = sshll.u32 %s264, 4
          %s274 = int_to_ptr.vmem [resolvable:$true] %s273
          %s275 = sshll.u32 %s271, 4
          %s276 = int_to_ptr.hbm [resolvable:$true] %s275
          %278 = dma.vmem_to_hbm [thread:$0]  %s274, 128, %s276, %s261
        $region40: #{tpu_custom_call.1} parent=27 // pred_fallthru
          _
      $region28: #{tpu_custom_call.1} parent=5 // pred_fallthru
        _
      %p279 = scmp.le.s32.totalorder 2, %s22
      // Predicated region
      $region41: #{tpu_custom_call.1} parent=5 // pred_check
        %p280 = pneg %p279
      $region42: #{tpu_custom_call.1} parent=5 // pred_check_branch
        %282 = sbr.rel (%p280) target = $region44
      $region43: #{tpu_custom_call.1} parent=5 // pred_region
        %s283 = ssub.s32 %s22, 2
        // Predicated region
        $region45: #{tpu_custom_call.1} parent=43 // pred_check
          %p284 = pneg %p93
        $region46: #{tpu_custom_call.1} parent=43 // pred_check_branch
          %286 = sbr.rel (%p284) target = $region48
        $region47: #{tpu_custom_call.1} parent=43 // pred_region
          %s287 = sand.u32 %s78, 1
          %s288 = scalar_lea.sflag [#allocation6], %s287
          %s289 = sand.u32 %s78, 1
          %s290 = smul.addr %s289, 8
          %s291 = scalar_lea.vmem [#allocation9], %s290
          %293 = dma.done %s288, 128
        $region48: #{tpu_custom_call.1} parent=43 // pred_fallthru
          _
      $region44: #{tpu_custom_call.1} parent=5 // pred_fallthru
        _
    $region6: #{tpu_custom_call.1} parent=1 // loop_footer
      %s26 = sadd.s32 1, %s22
    $region7: #{tpu_custom_call.1} parent=1 // loop_footer_branch
      %21 = sbr.rel target = $region3
    $region8: #{tpu_custom_call.1} parent=1 // loop_exit
      _
    %294 = vsyncpa [#allocation5], 1
    %s295 = scalar_lea.sflag [#allocation5], 1
    %296 = vsyncpa %s295, 1
    %297 = vsyncpa [#allocation8], 1
    %298 = vsyncpa [#allocation6], 1
    %s299 = scalar_lea.sflag [#allocation6], 1
    %300 = vsyncpa %s299, 1

</llo_original>
